<compile_context>
chip_gen: v5e
topology: v5e:2x2
jax: 0.10.0
libtpu: 0.0.40
codegen_flags: <defaults>
</compile_context>

<pallas_src>
import jax
import jax.numpy as jnp
import numpy as np
from jax import lax
from jax.experimental import pallas as pl

# ----------------------------- configuration -------------------------------
PAD_IDX = 0
VOCAB = 64
DIM = 32            # args.dimension (embedding / encoder dimension)
RNN_DIM = 16        # args.rnn_dimension (!= DIM -> projection branch is active)
RNN_LAYERS = 1      # args.rnn_layers > 0
TRANSFORMER_LAYERS = 0
LN_EPS = 1e-6       # genienlp LayerNorm eps
POOL_OUT = 2 * RNN_DIM * RNN_LAYERS


def _fast_recip(x):
    """1/x via the EUP approximate reciprocal plus one Newton-Raphson step (~f32 accurate)."""
    r = pl.reciprocal(x, approx=True)
    return r * (2.0 - x * r)


# -------------------- fused Pallas kernel (single launch, no grid) ----------
def identity_encoder_kernel(tok_ref, emb_ref, par_ref,
                            ctx_emb_ref, fc_ref, fq_ref, h0_ref, c0_ref):
    f32 = jnp.float32
    V, D = emb_ref.shape
    B, Sc, _ = ctx_emb_ref.shape
    Sq = fq_ref.shape[1]
    R = fc_ref.shape[2]
    L = h0_ref.shape[0]
    POOL = 2 * L * R
    St = Sc + Sq
    NT = B * St

    # ---- unpack the single packed parameter slab (static slices of one VMEM value) ----
    P = par_ref[...]                                     # (3*D + 4, W)
    wp    = P[0 * D:1 * D, 0:R]                          # Linear(dim, rnn_dim, bias=False)
    w1    = P[1 * D:2 * D, 0:D]                          # pool: Feedforward weight
    w2    = P[2 * D:3 * D, 0:POOL]                       # pool: output Linear weight
    b1    = P[3 * D + 0:3 * D + 1, 0:D]                  # (1, D)
    b2    = P[3 * D + 1:3 * D + 2, 0:POOL]               # (1, POOL)
    gamma = P[3 * D + 2:3 * D + 3, 0:POOL]               # LayerNorm gamma
    beta  = P[3 * D + 3:3 * D + 4, 0:POOL]               # LayerNorm beta

    # ---- CombinedEmbedding: in-kernel gather as one_hot(token) @ table on the MXU ----
    toks = tok_ref[0:NT, :]                              # (NT, 1) i32: per-batch [ctx | q] rows
    lengths = tok_ref[NT:NT + B, :].astype(f32)          # (B, 1)  batch.context.length
    onehot = (toks == lax.broadcasted_iota(jnp.int32, (NT, V), 1)).astype(f32)   # (NT, V)
    emb = emb_ref[...]                                   # (V, D)
    all_emb = jnp.dot(onehot, emb, preferred_element_type=f32)                   # (NT, D)

    # ---- dropout (identity, eval mode) + projection Linear(dim -> rnn_dim) ----
    proj = jnp.dot(all_emb, wp, preferred_element_type=f32)                      # (NT, R)

    # ---- emit final layouts directly (8-row-aligned slices; no wrapper reshapes) ----
    for b in range(B):
        base = b * St
        ctx_emb_ref[b, :, :] = all_emb[base:base + Sc, :]
        fc_ref[b, :, :] = proj[base:base + Sc, :]
        fq_ref[b, :, :] = proj[base + Sc:base + St, :]

    # ---- rnn_zero_state == 'average' (masked mean over context, entirely on the MXU) ----
    # sel[b, j] selects batch b's context rows of the flat token slab; counts = sel@onehot
    # is the per-batch vocab histogram; zeroing its PAD column reproduces
    # masked_fill(context_padding, 0); counts @ table is the masked sum over the sequence.
    col = lax.broadcasted_iota(jnp.int32, (B, NT), 1)
    start = lax.broadcasted_iota(jnp.int32, (B, NT), 0) * St
    sel = jnp.logical_and(col >= start, col < start + Sc).astype(f32)            # (B, NT)
    counts = jnp.dot(sel, onehot, preferred_element_type=f32)                    # (B, V)
    vocab_id = lax.broadcasted_iota(jnp.int32, (B, V), 1)
    counts = jnp.where(vocab_id == PAD_IDX, 0.0, counts)                         # masked_fill
    summed = jnp.dot(counts, emb, preferred_element_type=f32)                    # (B, D)
    # Divide by batch.context.length exactly (no zero-length guard: matches the module,
    # and an exact divide keeps the pool-MLP input bit-stable against the reference).
    avg = summed / lengths

    # ---- LinearFeedforward(pool): relu(x @ W1 + b1) @ W2 + b2 (dropouts = identity) ----
    h = jnp.maximum(jnp.dot(avg, w1, preferred_element_type=f32) + b1, 0.0)
    y = jnp.dot(h, w2, preferred_element_type=f32) + b2                          # (B, POOL)

    # ---- genienlp LayerNorm: gamma * (x - mean) / (std + eps) + beta, torch.std (Bessel) ----
    mu = jnp.mean(y, axis=-1, keepdims=True)
    var = jnp.sum((y - mu) ** 2, axis=-1, keepdims=True) * (1.0 / (POOL - 1))
    inv = _fast_recip(jnp.sqrt(var) + LN_EPS)            # EUP approx recip + 1 NR step
    packed = gamma * (y - mu) * inv + beta                                       # (B, POOL)

    # ---- (h0, c0): reshape(B,2,L,R) -> transpose(0,1) -> transpose(1,2) -> chunk(2), done
    #      here so the wrapper needs zero post-kernel ops ----
    for l in range(L):
        h0_ref[l, :, :] = packed[:, l * R:(l + 1) * R]
        c0_ref[l, :, :] = packed[:, (L + l) * R:(L + l + 1) * R]


# ----------------------------- parameter packing ----------------------------
def pack_param_slab(params):
    """Pack the 7 small parameter tensors into one (3*D + 4, W) f32 slab (single DMA)."""
    wp, w1, w2 = params["w_proj"], params["w1"], params["w2"]
    vecs = [params["b1"], params["b2"], params["gamma"], params["beta"]]
    W = max(wp.shape[1], w1.shape[1], w2.shape[1], *[v.shape[0] for v in vecs])

    def pad_cols(a):
        return jnp.pad(a, ((0, 0), (0, W - a.shape[1])))

    rows = [pad_cols(wp), pad_cols(w1), pad_cols(w2)] + [pad_cols(v[None, :]) for v in vecs]
    return jnp.concatenate(rows, axis=0).astype(jnp.float32)


# ----------------------------- forward wrapper ------------------------------
@jax.jit
def identity_encoder_forward(packed_params, context, context_lengths, question,
                             question_lengths):
    emb_table = packed_params["embedding"]               # (V, D) f32
    slab = packed_params["slab"]                         # (3*D + 4, W) f32
    B, Sc = context.shape
    _, Sq = question.shape
    V, D = emb_table.shape
    R, L = RNN_DIM, RNN_LAYERS
    NT = B * (Sc + Sq)

    # Flat int32 slab: per-batch [context | question] token ids, then context_lengths.
    ids = jnp.concatenate([context, question], axis=1).reshape(-1)
    tok = jnp.concatenate([ids, context_lengths.astype(jnp.int32)]).reshape(-1, 1)

    flops = 2 * (NT * V * D + NT * D * R + B * NT * V + B * V * D
                 + B * D * D + B * D * (2 * L * R))
    bytes_accessed = 4 * (tok.size + emb_table.size + slab.size
                          + B * Sc * D + B * Sc * R + B * Sq * R + 2 * L * B * R)

    ctx_emb, fc, fq, h0, c0 = pl.pallas_call(
        identity_encoder_kernel,
        out_shape=(
            jax.ShapeDtypeStruct((B, Sc, D), jnp.float32),   # context embeddings (last layer)
            jax.ShapeDtypeStruct((B, Sc, R), jnp.float32),   # final_context
            jax.ShapeDtypeStruct((B, Sq, R), jnp.float32),   # final_question
            jax.ShapeDtypeStruct((L, B, R), jnp.float32),    # h0
            jax.ShapeDtypeStruct((L, B, R), jnp.float32),    # c0
        ),
        cost_estimate=pl.CostEstimate(flops=flops, transcendentals=3 * B,
                                      bytes_accessed=bytes_accessed),
    )(tok, emb_table, slab)

    # all_layers[-(transformer_layers + 1):] with a word-embedding backbone (1 layer).
    self_attended_context = [ctx_emb][-(TRANSFORMER_LAYERS + 1):]
    context_rnn_state = (h0, c0)
    question_rnn_state = None
    return (self_attended_context, fc, context_rnn_state, fq, question_rnn_state)


# ------------------------------ pure-JAX reference ---------------------------
def reference_forward(params, context, context_lengths, question, question_lengths):
    emb = params["embedding"]
    ce = emb[context]
    qe = emb[question]
    fc = ce @ params["w_proj"]
    fq = qe @ params["w_proj"]
    keep = (context != PAD_IDX).astype(jnp.float32)
    summed = jnp.sum(ce * keep[..., None], axis=1)
    avg = summed / context_lengths[:, None].astype(jnp.float32)
    h = jnp.maximum(avg @ params["w1"] + params["b1"], 0.0)
    y = h @ params["w2"] + params["b2"]
    mu = y.mean(-1, keepdims=True)
    std = jnp.sqrt(((y - mu) ** 2).sum(-1, keepdims=True) / (y.shape[-1] - 1))
    pk = params["gamma"] * (y - mu) / (std + LN_EPS) + params["beta"]
    B = context.shape[0]
    pk = pk.reshape(B, 2, RNN_LAYERS, RNN_DIM)
    pk = jnp.swapaxes(pk, 0, 1)
    pk = jnp.swapaxes(pk, 1, 2)
    return [ce], fc, (pk[0], pk[1]), fq, None


# ------------------------------------ main -----------------------------------
if __name__ == "__main__":
    key = jax.random.PRNGKey(0)
    k_emb, k_proj, k_w1, k_b1, k_w2, k_b2, k_ctx, k_q = jax.random.split(key, 8)

    B, S_C, S_Q = 2, 8, 8

    # Deterministic synthetic parameters (shapes implied by the module __init__).
    embedding = 0.02 * jax.random.normal(k_emb, (VOCAB, DIM), dtype=jnp.float32)
    # Store the table at bf16-representable values: the in-kernel one_hot @ table gather
    # is then bit-exact regardless of the MXU's f32 pass count.
    embedding = embedding.astype(jnp.bfloat16).astype(jnp.float32)
    embedding = embedding.at[PAD_IDX].set(0.0)
    params = {
        "embedding": embedding,
        # nn.Linear(dim, rnn_dim, bias=False): stored here as (in, out) = W.T
        "w_proj": jax.random.normal(k_proj, (DIM, RNN_DIM), jnp.float32) / np.sqrt(DIM),
        # LinearFeedforward(dim, dim, 2*rnn_dim*rnn_layers)
        "w1": jax.random.normal(k_w1, (DIM, DIM), jnp.float32) / np.sqrt(DIM),
        "b1": 0.1 * jax.random.normal(k_b1, (DIM,), jnp.float32),
        "w2": jax.random.normal(k_w2, (DIM, POOL_OUT), jnp.float32) / np.sqrt(DIM),
        "b2": 0.1 * jax.random.normal(k_b2, (POOL_OUT,), jnp.float32),
        # LayerNorm(2*rnn_dim*rnn_layers)
        "gamma": jnp.ones((POOL_OUT,), jnp.float32),
        "beta": jnp.zeros((POOL_OUT,), jnp.float32),
    }
    # One-time packing (outside the jitted forward): table + single parameter slab.
    packed_params = {"embedding": params["embedding"], "slab": pack_param_slab(params)}

    # Deterministic token batches with trailing padding.
    context = jax.random.randint(k_ctx, (B, S_C), 1, VOCAB, dtype=jnp.int32)
    question = jax.random.randint(k_q, (B, S_Q), 1, VOCAB, dtype=jnp.int32)
    context_lengths = jnp.array([S_C, 5], dtype=jnp.int32)
    question_lengths = jnp.array([6, S_Q], dtype=jnp.int32)
    pos_c = jax.lax.broadcasted_iota(jnp.int32, (B, S_C), 1)
    pos_q = jax.lax.broadcasted_iota(jnp.int32, (B, S_Q), 1)
    context = jnp.where(pos_c < context_lengths[:, None], context, PAD_IDX)
    question = jnp.where(pos_q < question_lengths[:, None], question, PAD_IDX)

    out = identity_encoder_forward(
        packed_params, context, context_lengths, question, question_lengths
    )
    out = jax.block_until_ready(out)
    ref = reference_forward(params, context, context_lengths, question, question_lengths)

    sa, fc, (h0, c0), fq, q_state = out
    sa_r, fc_r, (h0_r, c0_r), fq_r, _ = ref

    np.testing.assert_allclose(np.asarray(sa[0]), np.asarray(sa_r[0]), rtol=1e-5, atol=1e-5)
    np.testing.assert_allclose(np.asarray(fc), np.asarray(fc_r), rtol=1e-5, atol=1e-5)
    np.testing.assert_allclose(np.asarray(fq), np.asarray(fq_r), rtol=1e-5, atol=1e-5)
    np.testing.assert_allclose(np.asarray(h0), np.asarray(h0_r), rtol=1e-5, atol=1e-5)
    np.testing.assert_allclose(np.asarray(c0), np.asarray(c0_r), rtol=1e-5, atol=1e-5)
    assert q_state is None
    assert fc.shape == (B, S_C, RNN_DIM) and fq.shape == (B, S_Q, RNN_DIM)
    assert h0.shape == (RNN_LAYERS, B, RNN_DIM) and c0.shape == (RNN_LAYERS, B, RNN_DIM)

    # TODO(synk): Dropout layers are treated as identity (eval mode); training-mode
    # stochastic dropout is not implemented here.
    print("KERNEL_OK")
</pallas_src>

<mosaic_0001>
module attributes {stable_mosaic.version = 11 : i64} {
  func.func @identity_encoder_kernel(%arg0: memref<34x1xi32, #tpu.memory_space<vmem>>, %arg1: memref<64x32xf32, #tpu.memory_space<vmem>>, %arg2: memref<100x32xf32, #tpu.memory_space<vmem>>, %arg3: memref<2x8x32xf32, #tpu.memory_space<vmem>>, %arg4: memref<2x8x16xf32, #tpu.memory_space<vmem>>, %arg5: memref<2x8x16xf32, #tpu.memory_space<vmem>>, %arg6: memref<1x2x16xf32, #tpu.memory_space<vmem>>, %arg7: memref<1x2x16xf32, #tpu.memory_space<vmem>>) attributes {dimension_semantics = [], scalar_prefetch = 0 : i64, scratch_operands = 0 : i64, tpu.core_type = #tpu.core_type<tc>} {
    %c0 = arith.constant 0 : index
    %c0_0 = arith.constant 0 : index
    %0 = vector.load %arg2[%c0, %c0_0] : memref<100x32xf32, #tpu.memory_space<vmem>>, vector<100x32xf32>
    %1 = vector.extract_strided_slice %0 {offsets = [0, 0], sizes = [32, 16], strides = [1, 1]} : vector<100x32xf32> to vector<32x16xf32>
    %2 = vector.extract_strided_slice %0 {offsets = [32, 0], sizes = [32, 32], strides = [1, 1]} : vector<100x32xf32> to vector<32x32xf32>
    %3 = vector.extract_strided_slice %0 {offsets = [64, 0], sizes = [32, 32], strides = [1, 1]} : vector<100x32xf32> to vector<32x32xf32>
    %4 = vector.extract_strided_slice %0 {offsets = [96, 0], sizes = [1, 32], strides = [1, 1]} : vector<100x32xf32> to vector<1x32xf32>
    %5 = vector.extract_strided_slice %0 {offsets = [97, 0], sizes = [1, 32], strides = [1, 1]} : vector<100x32xf32> to vector<1x32xf32>
    %6 = vector.extract_strided_slice %0 {offsets = [98, 0], sizes = [1, 32], strides = [1, 1]} : vector<100x32xf32> to vector<1x32xf32>
    %7 = vector.extract_strided_slice %0 {offsets = [99, 0], sizes = [1, 32], strides = [1, 1]} : vector<100x32xf32> to vector<1x32xf32>
    %c0_1 = arith.constant 0 : index
    %c0_2 = arith.constant 0 : index
    %8 = vector.load %arg0[%c0_1, %c0_2] : memref<34x1xi32, #tpu.memory_space<vmem>>, vector<32x1xi32>
    %c32 = arith.constant 32 : index
    %c0_3 = arith.constant 0 : index
    %9 = vector.load %arg0[%c32, %c0_3] : memref<34x1xi32, #tpu.memory_space<vmem>>, vector<2x1xi32>
    %10 = arith.sitofp %9 : vector<2x1xi32> to vector<2x1xf32>
    %11 = tpu.iota {dimensions = array<i32: 1>} : vector<32x64xi32>
    %12 = vector.broadcast %8 : vector<32x1xi32> to vector<32x64xi32>
    %13 = arith.cmpi eq, %12, %11 : vector<32x64xi32>
    %14 = arith.extui %13 : vector<32x64xi1> to vector<32x64xi32>
    %15 = arith.sitofp %14 : vector<32x64xi32> to vector<32x64xf32>
    %c0_4 = arith.constant 0 : index
    %c0_5 = arith.constant 0 : index
    %16 = vector.load %arg1[%c0_4, %c0_5] : memref<64x32xf32, #tpu.memory_space<vmem>>, vector<64x32xf32>
    %cst = arith.constant dense<0.000000e+00> : vector<32x32xf32>
    %17 = tpu.matmul %15, %16, %cst {dimension_numbers = #tpu.dot_dimension_numbers<[1], [0], [0], [1], [0, 0, 1, 1], [], []>} : vector<32x64xf32>, vector<64x32xf32>, vector<32x32xf32> -> vector<32x32xf32>
    %cst_6 = arith.constant dense<0.000000e+00> : vector<32x16xf32>
    %18 = tpu.matmul %17, %1, %cst_6 {dimension_numbers = #tpu.dot_dimension_numbers<[1], [0], [0], [1], [0, 0, 1, 1], [], []>} : vector<32x32xf32>, vector<32x16xf32>, vector<32x16xf32> -> vector<32x16xf32>
    %19 = vector.extract_strided_slice %17 {offsets = [0, 0], sizes = [8, 32], strides = [1, 1]} : vector<32x32xf32> to vector<8x32xf32>
    %c0_7 = arith.constant 0 : index
    %c0_8 = arith.constant 0 : index
    %c0_9 = arith.constant 0 : index
    %20 = vector.load %arg3[%c0_7, %c0_8, %c0_9] : memref<2x8x32xf32, #tpu.memory_space<vmem>>, vector<1x8x32xf32>
    %21 = vector.shape_cast %20 : vector<1x8x32xf32> to vector<8x32xf32>
    %22 = vector.shape_cast %19 : vector<8x32xf32> to vector<1x8x32xf32>
    tpu.vector_store %arg3[%c0_7, %c0_8, %c0_9], %22 {strides = array<i32>} : memref<2x8x32xf32, #tpu.memory_space<vmem>>, vector<1x8x32xf32>,
    %23 = vector.extract_strided_slice %18 {offsets = [0, 0], sizes = [8, 16], strides = [1, 1]} : vector<32x16xf32> to vector<8x16xf32>
    %c0_10 = arith.constant 0 : index
    %c0_11 = arith.constant 0 : index
    %c0_12 = arith.constant 0 : index
    %24 = vector.load %arg4[%c0_10, %c0_11, %c0_12] : memref<2x8x16xf32, #tpu.memory_space<vmem>>, vector<1x8x16xf32>
    %25 = vector.shape_cast %24 : vector<1x8x16xf32> to vector<8x16xf32>
    %26 = vector.shape_cast %23 : vector<8x16xf32> to vector<1x8x16xf32>
    tpu.vector_store %arg4[%c0_10, %c0_11, %c0_12], %26 {strides = array<i32>} : memref<2x8x16xf32, #tpu.memory_space<vmem>>, vector<1x8x16xf32>,
    %27 = vector.extract_strided_slice %18 {offsets = [8, 0], sizes = [8, 16], strides = [1, 1]} : vector<32x16xf32> to vector<8x16xf32>
    %c0_13 = arith.constant 0 : index
    %c0_14 = arith.constant 0 : index
    %c0_15 = arith.constant 0 : index
    %28 = vector.load %arg5[%c0_13, %c0_14, %c0_15] : memref<2x8x16xf32, #tpu.memory_space<vmem>>, vector<1x8x16xf32>
    %29 = vector.shape_cast %28 : vector<1x8x16xf32> to vector<8x16xf32>
    %30 = vector.shape_cast %27 : vector<8x16xf32> to vector<1x8x16xf32>
    tpu.vector_store %arg5[%c0_13, %c0_14, %c0_15], %30 {strides = array<i32>} : memref<2x8x16xf32, #tpu.memory_space<vmem>>, vector<1x8x16xf32>,
    %31 = vector.extract_strided_slice %17 {offsets = [16, 0], sizes = [8, 32], strides = [1, 1]} : vector<32x32xf32> to vector<8x32xf32>
    %c1 = arith.constant 1 : index
    %c0_16 = arith.constant 0 : index
    %c0_17 = arith.constant 0 : index
    %32 = vector.load %arg3[%c1, %c0_16, %c0_17] : memref<2x8x32xf32, #tpu.memory_space<vmem>>, vector<1x8x32xf32>
    %33 = vector.shape_cast %32 : vector<1x8x32xf32> to vector<8x32xf32>
    %34 = vector.shape_cast %31 : vector<8x32xf32> to vector<1x8x32xf32>
    tpu.vector_store %arg3[%c1, %c0_16, %c0_17], %34 {strides = array<i32>} : memref<2x8x32xf32, #tpu.memory_space<vmem>>, vector<1x8x32xf32>,
    %35 = vector.extract_strided_slice %18 {offsets = [16, 0], sizes = [8, 16], strides = [1, 1]} : vector<32x16xf32> to vector<8x16xf32>
    %c1_18 = arith.constant 1 : index
    %c0_19 = arith.constant 0 : index
    %c0_20 = arith.constant 0 : index
    %36 = vector.load %arg4[%c1_18, %c0_19, %c0_20] : memref<2x8x16xf32, #tpu.memory_space<vmem>>, vector<1x8x16xf32>
    %37 = vector.shape_cast %36 : vector<1x8x16xf32> to vector<8x16xf32>
    %38 = vector.shape_cast %35 : vector<8x16xf32> to vector<1x8x16xf32>
    tpu.vector_store %arg4[%c1_18, %c0_19, %c0_20], %38 {strides = array<i32>} : memref<2x8x16xf32, #tpu.memory_space<vmem>>, vector<1x8x16xf32>,
    %39 = vector.extract_strided_slice %18 {offsets = [24, 0], sizes = [8, 16], strides = [1, 1]} : vector<32x16xf32> to vector<8x16xf32>
    %c1_21 = arith.constant 1 : index
    %c0_22 = arith.constant 0 : index
    %c0_23 = arith.constant 0 : index
    %40 = vector.load %arg5[%c1_21, %c0_22, %c0_23] : memref<2x8x16xf32, #tpu.memory_space<vmem>>, vector<1x8x16xf32>
    %41 = vector.shape_cast %40 : vector<1x8x16xf32> to vector<8x16xf32>
    %42 = vector.shape_cast %39 : vector<8x16xf32> to vector<1x8x16xf32>
    tpu.vector_store %arg5[%c1_21, %c0_22, %c0_23], %42 {strides = array<i32>} : memref<2x8x16xf32, #tpu.memory_space<vmem>>, vector<1x8x16xf32>,
    %43 = tpu.iota {dimensions = array<i32: 1>} : vector<2x32xi32>
    %44 = tpu.iota {dimensions = array<i32: 0>} : vector<2x32xi32>
    %c16_i32 = arith.constant 16 : i32
    %45 = vector.broadcast %c16_i32 : i32 to vector<2x32xi32>
    %46 = arith.muli %44, %45 : vector<2x32xi32>
    %47 = arith.cmpi sge, %43, %46 : vector<2x32xi32>
    %c8_i32 = arith.constant 8 : i32
    %48 = vector.broadcast %c8_i32 : i32 to vector<2x32xi32>
    %49 = arith.addi %46, %48 : vector<2x32xi32>
    %50 = arith.cmpi slt, %43, %49 : vector<2x32xi32>
    %51 = arith.andi %47, %50 : vector<2x32xi1>
    %52 = arith.extui %51 : vector<2x32xi1> to vector<2x32xi32>
    %53 = arith.sitofp %52 : vector<2x32xi32> to vector<2x32xf32>
    %cst_24 = arith.constant dense<0.000000e+00> : vector<2x64xf32>
    %54 = tpu.matmul %53, %15, %cst_24 {dimension_numbers = #tpu.dot_dimension_numbers<[1], [0], [0], [1], [0, 0, 1, 1], [], []>} : vector<2x32xf32>, vector<32x64xf32>, vector<2x64xf32> -> vector<2x64xf32>
    %55 = tpu.iota {dimensions = array<i32: 1>} : vector<2x64xi32>
    %c0_i32 = arith.constant 0 : i32
    %56 = vector.broadcast %c0_i32 : i32 to vector<2x64xi32>
    %57 = arith.cmpi eq, %55, %56 : vector<2x64xi32>
    %cst_25 = arith.constant 0.000000e+00 : f32
    %58 = vector.broadcast %cst_25 : f32 to vector<2x64xf32>
    %59 = arith.select %57, %58, %54 : vector<2x64xi1>, vector<2x64xf32>
    %cst_26 = arith.constant dense<0.000000e+00> : vector<2x32xf32>
    %60 = tpu.matmul %59, %16, %cst_26 {dimension_numbers = #tpu.dot_dimension_numbers<[1], [0], [0], [1], [0, 0, 1, 1], [], []>} : vector<2x64xf32>, vector<64x32xf32>, vector<2x32xf32> -> vector<2x32xf32>
    %61 = vector.broadcast %10 : vector<2x1xf32> to vector<2x32xf32>
    %62 = arith.divf %60, %61 : vector<2x32xf32>
    %cst_27 = arith.constant dense<0.000000e+00> : vector<2x32xf32>
    %63 = tpu.matmul %62, %2, %cst_27 {dimension_numbers = #tpu.dot_dimension_numbers<[1], [0], [0], [1], [0, 0, 1, 1], [], []>} : vector<2x32xf32>, vector<32x32xf32>, vector<2x32xf32> -> vector<2x32xf32>
    %64 = vector.broadcast %4 : vector<1x32xf32> to vector<2x32xf32>
    %65 = arith.addf %63, %64 : vector<2x32xf32>
    %cst_28 = arith.constant 0.000000e+00 : f32
    %66 = vector.broadcast %cst_28 : f32 to vector<2x32xf32>
    %67 = arith.maximumf %65, %66 : vector<2x32xf32>
    %cst_29 = arith.constant dense<0.000000e+00> : vector<2x32xf32>
    %68 = tpu.matmul %67, %3, %cst_29 {dimension_numbers = #tpu.dot_dimension_numbers<[1], [0], [0], [1], [0, 0, 1, 1], [], []>} : vector<2x32xf32>, vector<32x32xf32>, vector<2x32xf32> -> vector<2x32xf32>
    %69 = vector.broadcast %5 : vector<1x32xf32> to vector<2x32xf32>
    %70 = arith.addf %68, %69 : vector<2x32xf32>
    %cst_30 = arith.constant dense<0.000000e+00> : vector<2xf32>
    %71 = vector.multi_reduction <add>, %70, %cst_30 [1] : vector<2x32xf32> to vector<2xf32>
    %72 = vector.shape_cast %71 : vector<2xf32> to vector<2x1xf32>
    %cst_31 = arith.constant 3.200000e+01 : f32
    %73 = vector.broadcast %cst_31 : f32 to vector<2x1xf32>
    %74 = arith.divf %72, %73 : vector<2x1xf32>
    %75 = vector.broadcast %74 : vector<2x1xf32> to vector<2x32xf32>
    %76 = arith.subf %70, %75 : vector<2x32xf32>
    %77 = arith.mulf %76, %76 : vector<2x32xf32>
    %cst_32 = arith.constant dense<0.000000e+00> : vector<2xf32>
    %78 = vector.multi_reduction <add>, %77, %cst_32 [1] : vector<2x32xf32> to vector<2xf32>
    %79 = vector.shape_cast %78 : vector<2xf32> to vector<2x1xf32>
    %cst_33 = arith.constant 0.0322580636 : f32
    %80 = vector.broadcast %cst_33 : f32 to vector<2x1xf32>
    %81 = arith.mulf %79, %80 : vector<2x1xf32>
    %82 = math.sqrt %81 : vector<2x1xf32>
    %cst_34 = arith.constant 9.99999997E-7 : f32
    %83 = vector.broadcast %cst_34 : f32 to vector<2x1xf32>
    %84 = arith.addf %82, %83 : vector<2x1xf32>
    %85 = tpu.reciprocal %84 {approx = true} : vector<2x1xf32> -> vector<2x1xf32>
    %86 = arith.mulf %84, %85 : vector<2x1xf32>
    %cst_35 = arith.constant 2.000000e+00 : f32
    %87 = vector.broadcast %cst_35 : f32 to vector<2x1xf32>
    %88 = arith.subf %87, %86 : vector<2x1xf32>
    %89 = arith.mulf %85, %88 : vector<2x1xf32>
    %90 = vector.broadcast %74 : vector<2x1xf32> to vector<2x32xf32>
    %91 = arith.subf %70, %90 : vector<2x32xf32>
    %92 = vector.broadcast %6 : vector<1x32xf32> to vector<2x32xf32>
    %93 = arith.mulf %92, %91 : vector<2x32xf32>
    %94 = vector.broadcast %89 : vector<2x1xf32> to vector<2x32xf32>
    %95 = arith.mulf %93, %94 : vector<2x32xf32>
    %96 = vector.broadcast %7 : vector<1x32xf32> to vector<2x32xf32>
    %97 = arith.addf %95, %96 : vector<2x32xf32>
    %98 = vector.extract_strided_slice %97 {offsets = [0, 0], sizes = [2, 16], strides = [1, 1]} : vector<2x32xf32> to vector<2x16xf32>
    %c0_36 = arith.constant 0 : index
    %c0_37 = arith.constant 0 : index
    %c0_38 = arith.constant 0 : index
    %99 = vector.load %arg6[%c0_36, %c0_37, %c0_38] : memref<1x2x16xf32, #tpu.memory_space<vmem>>, vector<1x2x16xf32>
    %100 = vector.shape_cast %99 : vector<1x2x16xf32> to vector<2x16xf32>
    %101 = vector.shape_cast %98 : vector<2x16xf32> to vector<1x2x16xf32>
    tpu.vector_store %arg6[%c0_36, %c0_37, %c0_38], %101 {strides = array<i32>} : memref<1x2x16xf32, #tpu.memory_space<vmem>>, vector<1x2x16xf32>,
    %102 = vector.extract_strided_slice %97 {offsets = [0, 16], sizes = [2, 16], strides = [1, 1]} : vector<2x32xf32> to vector<2x16xf32>
    %c0_39 = arith.constant 0 : index
    %c0_40 = arith.constant 0 : index
    %c0_41 = arith.constant 0 : index
    %103 = vector.load %arg7[%c0_39, %c0_40, %c0_41] : memref<1x2x16xf32, #tpu.memory_space<vmem>>, vector<1x2x16xf32>
    %104 = vector.shape_cast %103 : vector<1x2x16xf32> to vector<2x16xf32>
    %105 = vector.shape_cast %102 : vector<2x16xf32> to vector<1x2x16xf32>
    tpu.vector_store %arg7[%c0_39, %c0_40, %c0_41], %105 {strides = array<i32>} : memref<1x2x16xf32, #tpu.memory_space<vmem>>, vector<1x2x16xf32>,
    return
  }
}

</mosaic_0001>

<llo_original>
// kernel: identity_encoder_forward.1
$region0: #{identity_encoder_forward.1}
  #allocation0 [shape = 'u32[]', space=smem, size = 0x4, offset = 0x4, fixed_abs, tag = 'smem constant byte address 0x4 - core index']
  #allocation1 [shape = 'u32[72,128]{1,0:T(1,128)}', space=vmem, size = 0x9000, scoped, tag = 'internal scratch']
  %s0 = inlined_call_operand.vmem [shape: s32[34,1], index: 0, kind: input, shape index: {}]
  %s1 = inlined_call_operand.vmem [shape: f32[64,32], index: 1, kind: input, shape index: {}]
  %s2 = inlined_call_operand.vmem [shape: f32[100,32], index: 2, kind: input, shape index: {}]
  %s3 = inlined_call_operand.hbm [shape: f32[2,8,32], index: 3, kind: output, shape index: {0}]
  %s4 = inlined_call_operand.hbm [shape: f32[2,8,16], index: 4, kind: output, shape index: {1}]
  %s5 = inlined_call_operand.hbm [shape: f32[2,8,16], index: 5, kind: output, shape index: {2}]
  %s6 = inlined_call_operand.hbm [shape: f32[1,2,16], index: 6, kind: output, shape index: {3}]
  %s7 = inlined_call_operand.hbm [shape: f32[1,2,16], index: 7, kind: output, shape index: {4}]
  %8 = xla_tuple %s3, %s4, %s5, %s6, %s7
  %s9 = sld [smem:[#allocation0]]
  $region54: #{identity_encoder_forward.1} parent=0
    _
  %s11 = ssub.s32 1, %s9
  %s12 = scalar_select 0, %s11, %s9
  $region1: #{identity_encoder_forward.1} parent=0
    #allocation2 [shape = 'u8[8192]{0}', space=vmem, size = 0x2000, scoped, tag = 'output window, operand 0, single buffered']
    #allocation3 [shape = 's32[1]{0}', space=sflag, size = 0x4, scoped, tag = 'scoped memory for identity_encoder_forward.1']
    #allocation4 [shape = 'u8[8192]{0}', space=vmem, size = 0x2000, scoped, tag = 'output window, operand 1, single buffered']
    #allocation5 [shape = 's32[1]{0}', space=sflag, size = 0x4, scoped, tag = 'scoped memory for identity_encoder_forward.1']
    #allocation6 [shape = 'u8[8192]{0}', space=vmem, size = 0x2000, scoped, tag = 'output window, operand 2, single buffered']
    #allocation7 [shape = 'u8[1024]{0}', space=vmem, size = 0x400, scoped, tag = 'output window, operand 3, single buffered']
    #allocation8 [shape = 's32[1]{0}', space=sflag, size = 0x4, scoped, tag = 'scoped memory for identity_encoder_forward.1']
    #allocation9 [shape = 'u8[1024]{0}', space=vmem, size = 0x400, scoped, tag = 'output window, operand 4, single buffered']
    %13 = vsyncpa [#allocation3], 0
    %14 = vsyncpa [#allocation5], 0
    %15 = vsyncpa [#allocation8], 0
    // Predicated region
    $region2: #{identity_encoder_forward.1} parent=1 // pred_check
      _
    $region3: #{identity_encoder_forward.1} parent=1 // pred_check_branch
      %17 = sbr.rel (0) target = $region5
    $region4: #{identity_encoder_forward.1} parent=1 // pred_region
      _
    $region5: #{identity_encoder_forward.1} parent=1 // pred_fallthru
      _
    // Predicated region
    $region6: #{identity_encoder_forward.1} parent=1 // pred_check
      _
    $region7: #{identity_encoder_forward.1} parent=1 // pred_check_branch
      %19 = sbr.rel (0) target = $region9
    $region8: #{identity_encoder_forward.1} parent=1 // pred_region
      _
    $region9: #{identity_encoder_forward.1} parent=1 // pred_fallthru
      _
    // Predicated region
    $region10: #{identity_encoder_forward.1} parent=1 // pred_check
      _
    $region11: #{identity_encoder_forward.1} parent=1 // pred_check_branch
      %21 = sbr.rel (0) target = $region13
    $region12: #{identity_encoder_forward.1} parent=1 // pred_region
      _
    $region13: #{identity_encoder_forward.1} parent=1 // pred_fallthru
      _
    %v22 = vld [vmem:[%s2] sm:$0xff]
    %v23 = vld [vmem:[%s2 + $0x8] sm:$0xff]
    %v24 = vld [vmem:[%s2 + $0x10] sm:$0xff]
    %v25 = vld [vmem:[%s2 + $0x18] sm:$0xff]
    %v26 = vld [vmem:[%s2 + $0x20] sm:$0xff]
    %v27 = vld [vmem:[%s2 + $0x28] sm:$0xff]
    %v28 = vld [vmem:[%s2 + $0x30] sm:$0xff]
    %v29 = vld [vmem:[%s2 + $0x38] sm:$0xff]
    %v30 = vld [vmem:[%s2 + $0x40] sm:$0xff]
    %v31 = vld [vmem:[%s2 + $0x48] sm:$0xff]
    %v32 = vld [vmem:[%s2 + $0x50] sm:$0xff]
    %v33 = vld [vmem:[%s2 + $0x58] sm:$0xff]
    %v34 = vld [vmem:[%s2 + $0x60] sm:$0xf]
    %v35 = vld [vmem:[%s0] sm:$0xff]
    %v36 = vld [vmem:[%s0 + $0x8] sm:$0xff]
    %v37 = vld [vmem:[%s0 + $0x10] sm:$0xff]
    %v38 = vld [vmem:[%s0 + $0x18] sm:$0xff]
    %v39 = vld [vmem:[%s0 + $0x20] sm:$0x3]
    %v40 = vcvt.s32.f32 %v39
    %v41 = vlaneseq
    %v42 = vand.u32 %v41, 127
    %43 = vset.pattern.permute.xlu0 0
    %44 = vperm.xlu0 %43, %v35
    %v45 = vpop.permute.xlu0 %44
    %46 = vset.pattern.permute.xlu0 0
    %47 = vperm.xlu0 %46, %v36
    %v48 = vpop.permute.xlu0 %47
    %49 = vset.pattern.permute.xlu0 0
    %50 = vperm.xlu0 %49, %v37
    %v51 = vpop.permute.xlu0 %50
    %52 = vset.pattern.permute.xlu0 0
    %53 = vperm.xlu0 %52, %v38
    %v54 = vpop.permute.xlu0 %53
    %vm55 = vcmp.eq.s32.totalorder %v45, %v42
    %vm56 = vcmp.eq.s32.totalorder %v48, %v42
    %vm57 = vcmp.eq.s32.totalorder %v51, %v42
    %vm58 = vcmp.eq.s32.totalorder %v54, %v42
    %v59 = vsel %vm55, 1, 0
    %v60 = vsel %vm56, 1, 0
    %v61 = vsel %vm57, 1, 0
    %v62 = vsel %vm58, 1, 0
    %v63 = vcvt.s32.f32 %v59
    %v64 = vcvt.s32.f32 %v60
    %v65 = vcvt.s32.f32 %v61
    %v66 = vcvt.s32.f32 %v62
    %v67 = vld [vmem:[%s1] sm:$0xff]
    %v68 = vld [vmem:[%s1 + $0x8] sm:$0xff]
    %v69 = vld [vmem:[%s1 + $0x10] sm:$0xff]
    %v70 = vld [vmem:[%s1 + $0x18] sm:$0xff]
    %v71 = vld [vmem:[%s1 + $0x20] sm:$0xff]
    %v72 = vld [vmem:[%s1 + $0x28] sm:$0xff]
    %v73 = vld [vmem:[%s1 + $0x30] sm:$0xff]
    %v74 = vld [vmem:[%s1 + $0x38] sm:$0xff]
    %vm75 = vcmask 523264
    %v77 = vsel %vm75, %v63, 0
    %v80 = vsel %vm75, %v64, 0
    %v83 = vsel %vm75, %v65, 0
    %v86 = vsel %vm75, %v66, 0
    %88 = vmatpush.msra.mxu0 0.0
    %89 = vmatpush.msra.mxu0 0.0
    %90 = vmatpush.msra.mxu0 0.0
    %91 = vmatpush.msra.mxu0 0.0
    %92 = vmatpush.msra.mxu0 0.0
    %93 = vmatpush.msra.mxu0 0.0
    %94 = vmatpush.msra.mxu0 0.0
    %95 = vmatpush.msra.mxu0 0.0
    %96 = vmatpush.msra.mxu0 %v74
    %97 = vmatpush.msra.mxu0 %v73
    %98 = vmatpush.msra.mxu0 %v72
    %99 = vmatpush.msra.mxu0 %v71
    %100 = vmatpush.msra.mxu0 %v70
    %101 = vmatpush.msra.mxu0 %v69
    %102 = vmatpush.msra.mxu0 %v68
    %103 = vmatpush.msra.mxu0 %v67
    %104 = vmatmul.f32.gmra.mxu0 %v77
    %v105 = vpop.f32.mrf.mxu0
    %v106 = vadd.f32 0.0, %v105
    %107 = vmatmul.f32.gmra.mxu0 %v80
    %v108 = vpop.f32.mrf.mxu0
    %v109 = vadd.f32 0.0, %v108
    %110 = vmatmul.f32.gmra.mxu0 %v83
    %v111 = vpop.f32.mrf.mxu0
    %v112 = vadd.f32 0.0, %v111
    %113 = vmatmul.f32.gmra.mxu0 %v86
    %v114 = vpop.f32.mrf.mxu0
    %v115 = vadd.f32 0.0, %v114
    %116 = vdwg.mxu0
    %vm117 = vcmask 261120
    %v119 = vsel %vm117, %v106, 0
    %v122 = vsel %vm117, %v109, 0
    %v125 = vsel %vm117, %v112, 0
    %v128 = vsel %vm117, %v115, 0
    %130 = vmatpush.msra.mxu0 0.0
    %131 = vmatpush.msra.mxu0 0.0
    %132 = vmatpush.msra.mxu0 0.0
    %133 = vmatpush.msra.mxu0 0.0
    %134 = vmatpush.msra.mxu0 0.0
    %135 = vmatpush.msra.mxu0 0.0
    %136 = vmatpush.msra.mxu0 0.0
    %137 = vmatpush.msra.mxu0 0.0
    %138 = vmatpush.msra.mxu0 0.0
    %139 = vmatpush.msra.mxu0 0.0
    %140 = vmatpush.msra.mxu0 0.0
    %141 = vmatpush.msra.mxu0 0.0
    %142 = vmatpush.msra.mxu0 %v25
    %143 = vmatpush.msra.mxu0 %v24
    %144 = vmatpush.msra.mxu0 %v23
    %145 = vmatpush.msra.mxu0 %v22
    %146 = vmatmul.f32.gmra.mxu0 %v119
    %v147 = vpop.f32.mrf.mxu0
    %v148 = vadd.f32 0.0, %v147
    %149 = vmatmul.f32.gmra.mxu0 %v122
    %v150 = vpop.f32.mrf.mxu0
    %v151 = vadd.f32 0.0, %v150
    %152 = vmatmul.f32.gmra.mxu0 %v125
    %v153 = vpop.f32.mrf.mxu0
    %v154 = vadd.f32 0.0, %v153
    %155 = vmatmul.f32.gmra.mxu0 %v128
    %v156 = vpop.f32.mrf.mxu0
    %v157 = vadd.f32 0.0, %v156
    %158 = vdwg.mxu0
    %159 = vst.msk [vmem:[#allocation2] sm:$0xff] %vm117, %v106
    %vm160 = vcmask 130048
    %161 = vst.msk [vmem:[#allocation4] sm:$0xff] %vm160, %v148
    %162 = vst.msk [vmem:[#allocation6] sm:$0xff] %vm160, %v151
    %s163 = scalar_lea.vmem [#allocation2], 8
    %164 = vst.msk [vmem:[%s163] sm:$0xff] %vm117, %v112
    %s165 = scalar_lea.vmem [#allocation4], 8
    %166 = vst.msk [vmem:[%s165] sm:$0xff] %vm160, %v154
    %s167 = scalar_lea.vmem [#allocation6], 8
    %168 = vst.msk [vmem:[%s167] sm:$0xff] %vm160, %v157
    %v169 = vlaneseq
    %v170 = vshrl.u32 %v169, 7
    %v171 = vmul.u32 %v170, 16
    %vm172 = vcmp.ge.s32.totalorder %v42, %v171
    %v173 = vadd.s32 %v171, 8
    %vm174 = vcmp.lt.s32.totalorder %v42, %v173
    %vm175 = vmand %vm172, %vm174
    %v176 = vsel %vm175, 1, 0
    %v177 = vcvt.s32.f32 %v176
    %v179 = vsel %vm117, %v177, 0
    %181 = vmatpush.msra.mxu0 0.0
    %182 = vmatpush.msra.mxu0 0.0
    %183 = vmatpush.msra.mxu0 0.0
    %184 = vmatpush.msra.mxu0 0.0
    %185 = vmatpush.msra.mxu0 0.0
    %186 = vmatpush.msra.mxu0 0.0
    %187 = vmatpush.msra.mxu0 0.0
    %188 = vmatpush.msra.mxu0 0.0
    %189 = vmatpush.msra.mxu0 0.0
    %190 = vmatpush.msra.mxu0 0.0
    %191 = vmatpush.msra.mxu0 0.0
    %192 = vmatpush.msra.mxu0 0.0
    %193 = vmatpush.msra.mxu0 %v66
    %194 = vmatpush.msra.mxu0 %v65
    %195 = vmatpush.msra.mxu0 %v64
    %196 = vmatpush.msra.mxu0 %v63
    %197 = vmatmul.f32.gmra.mxu0 %v179
    %v198 = vpop.f32.mrf.mxu0
    %v199 = vadd.f32 0.0, %v198
    %200 = vdwg.mxu0
    %vm201 = vcmp.eq.s32.totalorder %v42, 0
    %v202 = vsel %vm201, 0.0, %v199
    %v204 = vsel %vm75, %v202, 0
    %206 = vmatpush.msra.mxu0 0.0
    %207 = vmatpush.msra.mxu0 0.0
    %208 = vmatpush.msra.mxu0 0.0
    %209 = vmatpush.msra.mxu0 0.0
    %210 = vmatpush.msra.mxu0 0.0
    %211 = vmatpush.msra.mxu0 0.0
    %212 = vmatpush.msra.mxu0 0.0
    %213 = vmatpush.msra.mxu0 0.0
    %214 = vmatpush.msra.mxu0 %v74
    %215 = vmatpush.msra.mxu0 %v73
    %216 = vmatpush.msra.mxu0 %v72
    %217 = vmatpush.msra.mxu0 %v71
    %218 = vmatpush.msra.mxu0 %v70
    %219 = vmatpush.msra.mxu0 %v69
    %220 = vmatpush.msra.mxu0 %v68
    %221 = vmatpush.msra.mxu0 %v67
    %222 = vmatmul.f32.gmra.mxu0 %v204
    %v223 = vpop.f32.mrf.mxu0
    %v224 = vadd.f32 0.0, %v223
    %225 = vdwg.mxu0
    %227 = vset.pattern.permute.xlu0 0
    %228 = vperm.xlu0 %227, %v40
    %v229 = vpop.permute.xlu0 %228
    %v231 = vrcp.pop %v229
    %v232 = vmul.f32 %v229, %v231
    %v233 = vsub.f32 1.0, %v232
    %v234 = vmul.f32 %v231, %v233
    %v235 = vadd.f32 %v231, %v234
    %vm236 = vweird.f32 %v229
    %vm237 = vweird.f32 %v231
    %vm238 = vmor %vm236, %vm237
    %v239 = vsel %vm238, %v231, %v235
    %v240 = vand.u32 2147483647, %v229
    %vm241 = vcmp.eq.f32.partialorder %v240, 8.507059e+37
    %v242 = vand.u32 %v229, 2147483648
    %v243 = vor.u32 1.1754944e-38, %v242
    %v244 = vsel %vm241, %v243, %v239
    %v245 = vmul.f32 %v224, %v244
    %v246 = vperm.slane %v34, 0
    %v248 = vsel %vm117, %v245, 0
    %250 = vmatpush.msra.mxu0 0.0
    %251 = vmatpush.msra.mxu0 0.0
    %252 = vmatpush.msra.mxu0 0.0
    %253 = vmatpush.msra.mxu0 0.0
    %254 = vmatpush.msra.mxu0 0.0
    %255 = vmatpush.msra.mxu0 0.0
    %256 = vmatpush.msra.mxu0 0.0
    %257 = vmatpush.msra.mxu0 0.0
    %258 = vmatpush.msra.mxu0 0.0
    %259 = vmatpush.msra.mxu0 0.0
    %260 = vmatpush.msra.mxu0 0.0
    %261 = vmatpush.msra.mxu0 0.0
    %262 = vmatpush.msra.mxu0 %v29
    %263 = vmatpush.msra.mxu0 %v28
    %264 = vmatpush.msra.mxu0 %v27
    %265 = vmatpush.msra.mxu0 %v26
    %266 = vmatmul.f32.gmra.mxu0 %v248
    %v267 = vpop.f32.mrf.mxu0
    %v268 = vadd.f32 %v246, %v267
    %269 = vdwg.mxu0
    %v270 = vmax.f32 %v268, 0.0
    %v271 = vperm.slane %v34, 1
    %v273 = vsel %vm117, %v270, 0
    %275 = vmatpush.msra.mxu0 0.0
    %276 = vmatpush.msra.mxu0 0.0
    %277 = vmatpush.msra.mxu0 0.0
    %278 = vmatpush.msra.mxu0 0.0
    %279 = vmatpush.msra.mxu0 0.0
    %280 = vmatpush.msra.mxu0 0.0
    %281 = vmatpush.msra.mxu0 0.0
    %282 = vmatpush.msra.mxu0 0.0
    %283 = vmatpush.msra.mxu0 0.0
    %284 = vmatpush.msra.mxu0 0.0
    %285 = vmatpush.msra.mxu0 0.0
    %286 = vmatpush.msra.mxu0 0.0
    %287 = vmatpush.msra.mxu0 %v33
    %288 = vmatpush.msra.mxu0 %v32
    %289 = vmatpush.msra.mxu0 %v31
    %290 = vmatpush.msra.mxu0 %v30
    %291 = vmatmul.f32.gmra.mxu0 %v273
    %v292 = vpop.f32.mrf.mxu0
    %v293 = vadd.f32 %v271, %v292
    %294 = vdwg.mxu0
    %vm295 = vcmask 254976
    %v296 = vsel %vm295, %v293, 0.0
    %297 = vadd.xlane.f32.xlu0 %v296
    %v298 = vpop.xlane.xlu0 %297
    %v299 = vrcp.pop 32.0
    %v300 = vmul.f32 32.0, %v299
    %v301 = vsub.f32 1.0, %v300
    %v302 = vmul.f32 %v299, %v301
    %v303 = vadd.f32 %v299, %v302
    %vm304 = vweird.f32 %v299
    %v305 = vsel %vm304, %v299, %v303
    %v306 = vmul.f32 %v298, %v305
    %v307 = vsub.f32 %v293, %v306
    %v308 = vmul.f32 %v307, %v307
    %v309 = vsel %vm295, %v308, 0.0
    %310 = vadd.xlane.f32.xlu0 %v309
    %v311 = vpop.xlane.xlu0 %310
    %v312 = vmul.f32 %v311, 0.032258064
    %v313 = vrsqrt.pop %v312
    %v314 = vmul.f32 %v313, %v312
    %v315 = vmul.f32 %v314, %v313
    %v316 = vmul.f32 0.5, %v315
    %v317 = vsub.f32 1.5, %v316
    %v318 = vmul.f32 %v313, %v317
    %v319 = vmul.f32 %v312, %v318
    %vm320 = vcmp.eq.f32.partialorder %v312, inf
    %v321 = vsel %vm320, %v312, %v319
    %vm322 = vcmp.eq.f32.partialorder %v312, 0.0
    %v323 = vand.u32 %v312, 2147483648
    %v324 = vsel %vm322, %v323, %v321
    %v325 = vadd.f32 %v324, 1e-06
    %v326 = vrcp.pop %v325
    %v327 = vmul.f32 %v325, %v326
    %v328 = vsub.f32 2.0, %v327
    %v329 = vmul.f32 %v326, %v328
    %v330 = vperm.slane %v34, 2
    %v331 = vmul.f32 %v330, %v307
    %v332 = vmul.f32 %v331, %v329
    %v333 = vperm.slane %v34, 3
    %v334 = vadd.f32 %v332, %v333
    %vm335 = vcmask 123904
    %336 = vst.msk [vmem:[#allocation7] sm:$0x3] %vm335, %v334
    %338 = vrot.lane.b32.xlu0 %v334, 112
    %v339 = vpop.permute.xlu0 %338
    %341 = vst.msk [vmem:[#allocation9] sm:$0x3] %vm335, %v339
    // Predicated region
    $region14: #{identity_encoder_forward.1} parent=1 // pred_check
      _
    $region15: #{identity_encoder_forward.1} parent=1 // pred_check_branch
      %343 = sbr.rel (0) target = $region17
    $region16: #{identity_encoder_forward.1} parent=1 // pred_region
      %345 = vsyncadd [#allocation3], 0
      %s346 = sshll.u32 [#allocation2], 4
      %s347 = int_to_ptr.vmem [resolvable:$true] %s346
      %s348 = sshll.u32 %s3, 4
      %s349 = int_to_ptr.hbm [resolvable:$true] %s348
      %354 = dma.vmem_to_hbm [thread:$0]  %s347, 256, %s349, [#allocation3], 128, 128, 8
    $region17: #{identity_encoder_forward.1} parent=1 // pred_fallthru
      _
    // Predicated region
    $region18: #{identity_encoder_forward.1} parent=1 // pred_check
      _
    $region19: #{identity_encoder_forward.1} parent=1 // pred_check_branch
      %356 = sbr.rel (0) target = $region21
    $region20: #{identity_encoder_forward.1} parent=1 // pred_region
      %358 = vsyncadd [#allocation5], 0
      %s359 = sshll.u32 [#allocation4], 4
      %s360 = int_to_ptr.vmem [resolvable:$true] %s359
      %s361 = sshll.u32 %s4, 4
      %s362 = int_to_ptr.hbm [resolvable:$true] %s361
      %367 = dma.vmem_to_hbm [thread:$0]  %s360, 256, %s362, [#allocation5], 128, 128, 8
    $region21: #{identity_encoder_forward.1} parent=1 // pred_fallthru
      _
    // Predicated region
    $region22: #{identity_encoder_forward.1} parent=1 // pred_check
      _
    $region23: #{identity_encoder_forward.1} parent=1 // pred_check_branch
      %369 = sbr.rel (0) target = $region25
    $region24: #{identity_encoder_forward.1} parent=1 // pred_region
      %371 = vsyncadd [#allocation5], 0
      %s372 = sshll.u32 [#allocation6], 4
      %s373 = int_to_ptr.vmem [resolvable:$true] %s372
      %s374 = sshll.u32 %s5, 4
      %s375 = int_to_ptr.hbm [resolvable:$true] %s374
      %380 = dma.vmem_to_hbm [thread:$0]  %s373, 256, %s375, [#allocation5], 128, 128, 8
    $region25: #{identity_encoder_forward.1} parent=1 // pred_fallthru
      _
    // Predicated region
    $region26: #{identity_encoder_forward.1} parent=1 // pred_check
      _
    $region27: #{identity_encoder_forward.1} parent=1 // pred_check_branch
      %382 = sbr.rel (0) target = $region29
    $region28: #{identity_encoder_forward.1} parent=1 // pred_region
      %384 = vsyncadd [#allocation8], 0
      %s386 = sshll.u32 [#allocation7], 4
      %s387 = int_to_ptr.vmem [resolvable:$true] %s386
      %s388 = sshll.u32 %s6, 4
      %s389 = int_to_ptr.hbm [resolvable:$true] %s388
      %391 = dma.vmem_to_hbm [thread:$0]  %s387, 32, %s389, [#allocation8]
    $region29: #{identity_encoder_forward.1} parent=1 // pred_fallthru
      _
    // Predicated region
    $region30: #{identity_encoder_forward.1} parent=1 // pred_check
      _
    $region31: #{identity_encoder_forward.1} parent=1 // pred_check_branch
      %393 = sbr.rel (0) target = $region33
    $region32: #{identity_encoder_forward.1} parent=1 // pred_region
      %395 = vsyncadd [#allocation8], 0
      %s397 = sshll.u32 [#allocation9], 4
      %s398 = int_to_ptr.vmem [resolvable:$true] %s397
      %s399 = sshll.u32 %s7, 4
      %s400 = int_to_ptr.hbm [resolvable:$true] %s399
      %402 = dma.vmem_to_hbm [thread:$0]  %s398, 32, %s400, [#allocation8]
    $region33: #{identity_encoder_forward.1} parent=1 // pred_fallthru
      _
    // Predicated region
    $region34: #{identity_encoder_forward.1} parent=1 // pred_check
      _
    $region35: #{identity_encoder_forward.1} parent=1 // pred_check_branch
      %404 = sbr.rel (0) target = $region37
    $region36: #{identity_encoder_forward.1} parent=1 // pred_region
      %406 = dma.done [#allocation3], 256
    $region37: #{identity_encoder_forward.1} parent=1 // pred_fallthru
      _
    // Predicated region
    $region38: #{identity_encoder_forward.1} parent=1 // pred_check
      _
    $region39: #{identity_encoder_forward.1} parent=1 // pred_check_branch
      %408 = sbr.rel (0) target = $region41
    $region40: #{identity_encoder_forward.1} parent=1 // pred_region
      %410 = dma.done [#allocation5], 256
    $region41: #{identity_encoder_forward.1} parent=1 // pred_fallthru
      _
    // Predicated region
    $region42: #{identity_encoder_forward.1} parent=1 // pred_check
      _
    $region43: #{identity_encoder_forward.1} parent=1 // pred_check_branch
      %412 = sbr.rel (0) target = $region45
    $region44: #{identity_encoder_forward.1} parent=1 // pred_region
      %414 = dma.done [#allocation5], 256
    $region45: #{identity_encoder_forward.1} parent=1 // pred_fallthru
      _
    // Predicated region
    $region46: #{identity_encoder_forward.1} parent=1 // pred_check
      _
    $region47: #{identity_encoder_forward.1} parent=1 // pred_check_branch
      %416 = sbr.rel (0) target = $region49
    $region48: #{identity_encoder_forward.1} parent=1 // pred_region
      %418 = dma.done [#allocation8], 32
    $region49: #{identity_encoder_forward.1} parent=1 // pred_fallthru
      _
    // Predicated region
    $region50: #{identity_encoder_forward.1} parent=1 // pred_check
      _
    $region51: #{identity_encoder_forward.1} parent=1 // pred_check_branch
      %420 = sbr.rel (0) target = $region53
    $region52: #{identity_encoder_forward.1} parent=1 // pred_region
      %422 = dma.done [#allocation8], 32
    $region53: #{identity_encoder_forward.1} parent=1 // pred_fallthru
      _
    %423 = vsyncpa [#allocation3], 1
    %424 = vsyncpa [#allocation5], 1
    %425 = vsyncpa [#allocation8], 1

</llo_original>
